<compile_context>
chip_gen: v7x
topology: tpu7x:2x2x1
jax: 0.10.0
libtpu: 0.0.40
codegen_flags: <defaults>
</compile_context>

<pallas_src>
import functools
import math

import jax
import jax.numpy as jnp
import numpy as np
from jax.experimental import pallas as pl
from jax.experimental.pallas import tpu as pltpu


def _vmem_limit_bytes():
    """Generation-aware VMEM budget: ~3/4 of physical, capped at 100 MiB.

    v5e/v6e (128 MiB physical) -> 96 MiB; v7x (64 MiB physical) -> 48 MiB.
    Falls back to a conservative 48 MiB if the hardware query is unavailable.
    """
    cap = None
    try:
        cap = getattr(pltpu.get_tpu_info(), "vmem_capacity_bytes", None)
    except Exception:
        cap = None
    if cap:
        return int(min(cap * 3 // 4, 100 * 1024 * 1024))
    return 48 * 1024 * 1024


VMEM_LIMIT = _vmem_limit_bytes()


def _pick_tile(dim, want, aligns=(256, 128, 8)):
    """Largest tile <= want dividing dim, preferring MXU-friendly (256/128) alignment."""
    if dim <= want:
        return dim
    for align in aligns:
        t = (want // align) * align
        while t >= align:
            if dim % t == 0:
                return t
            t -= align
    return dim


# ---------------------------------------------------------------------------
# Kernel 1: tiled fused linear (x @ W + b) -- used for c_attn
# ---------------------------------------------------------------------------
def _linear_kernel(x_ref, w_ref, b_ref, o_ref, acc_ref):
    k = pl.program_id(2)

    @pl.when(k == 0)
    def _():
        acc_ref[...] = jnp.zeros_like(acc_ref)

    # bf16 operands feed the MXU at native rate on all generations; f32 accumulation.
    acc_ref[...] += jnp.dot(x_ref[...].astype(jnp.bfloat16),
                            w_ref[...].astype(jnp.bfloat16),
                            preferred_element_type=jnp.float32)

    @pl.when(k == pl.num_programs(2) - 1)
    def _():
        # Bias (f32) added exactly once, on the final K step.
        o_ref[...] = (acc_ref[...] + b_ref[...]).astype(o_ref.dtype)


def pallas_linear(x2d, w, b, *, tm=512, tn=512, tk=512, out_dtype=jnp.float32):
    """x2d: (M, K), w: (K, Nout), b: (Nout,) f32 -> (M, Nout) out_dtype."""
    M, K = x2d.shape
    Nout = w.shape[1]
    tm = _pick_tile(M, tm)
    tn = _pick_tile(Nout, tn)
    tk = _pick_tile(K, tk)
    b2d = b.reshape(1, Nout).astype(jnp.float32)
    grid = (M // tm, Nout // tn, K // tk)
    return pl.pallas_call(
        _linear_kernel,
        out_shape=jax.ShapeDtypeStruct((M, Nout), out_dtype),
        grid_spec=pltpu.PrefetchScalarGridSpec(
            num_scalar_prefetch=0,
            grid=grid,
            in_specs=[
                pl.BlockSpec((tm, tk), lambda i, j, k: (i, k)),
                pl.BlockSpec((tk, tn), lambda i, j, k: (k, j)),
                pl.BlockSpec((1, tn), lambda i, j, k: (0, j)),
            ],
            out_specs=pl.BlockSpec((tm, tn), lambda i, j, k: (i, j)),
            scratch_shapes=[pltpu.VMEM((tm, tn), jnp.float32)],
        ),
        compiler_params=pltpu.CompilerParams(
            dimension_semantics=("parallel", "parallel", "arbitrary"),
            vmem_limit_bytes=VMEM_LIMIT,
        ),
    )(x2d, w, b2d)


# ---------------------------------------------------------------------------
# Kernel 2: attention, grid=(batch, query-tile), all heads per step,
#           head-major output (the head merge is folded into c_proj)
# ---------------------------------------------------------------------------
def _attn_kernel(qkv_q_ref, qkv_kv_ref, o_ref, *, n_heads, scale):
    # qkv_q_ref : (1, tq, 3N) bf16 -- query rows of this grid step (all heads fused)
    # qkv_kv_ref: (1, T,  3N) bf16 -- full-sequence fused qkv for this batch element
    #                                 (block index ignores the q-tile axis -> fetched once per b)
    # o_ref     : (n_heads, 1, tq, hd) bf16 -- head-major output
    N = qkv_kv_ref.shape[2] // 3
    hd = N // n_heads

    # Static unroll over heads; each head's output is stored before the next head starts,
    # so live ranges stay bounded and there is no lane-axis concatenate.
    # TODO(synk): for sequences where the (T, 3N) kv slab itself exceeds VMEM, switch to a
    # kv-tiled online-softmax (flash) loop with per-head m/l/acc scratch.
    for h in range(n_heads):
        # Ref-level static slices: only the hd lanes each head needs are loaded.
        q = qkv_q_ref[0, :, h * hd:(h + 1) * hd]
        k = qkv_kv_ref[0, :, N + h * hd:N + (h + 1) * hd]
        v = qkv_kv_ref[0, :, 2 * N + h * hd:2 * N + (h + 1) * hd]

        # Fold the 1/sqrt(T) scale into q: tq*hd multiplies instead of tq*T.
        q = (q * scale).astype(jnp.bfloat16)
        k = k.astype(jnp.bfloat16)
        v = v.astype(jnp.bfloat16)

        # q @ k^T on the MXU (bf16 operands, f32 result), no explicit transpose.
        att = jax.lax.dot_general(
            q, k, dimension_numbers=(((1,), (1,)), ((), ())),
            preferred_element_type=jnp.float32)                      # (tq, T) f32

        # NOTE: no causal mask, matching the reference (masked_fill result is discarded).
        # Softmax kept in f32 (safe on v5e, which has no bf16 VPU/EUP).
        m = jnp.max(att, axis=-1, keepdims=True)
        p = jnp.exp(att - m)
        denom = jnp.sum(p, axis=-1, keepdims=True)
        p = p * pl.reciprocal(denom, approx=True)                    # EUP vrcp

        out_h = jnp.dot(p.astype(jnp.bfloat16), v,
                        preferred_element_type=jnp.float32)          # (tq, hd) f32

        # Per-head immediate store into the head-major output slab.
        o_ref[h, 0, :, :] = out_h.astype(o_ref.dtype)


def pallas_attention(qkv, n_heads, scale, *, tq=256):
    """qkv: (B, T, 3N) bf16 -> (n_heads, B, T, hd) bf16 head-major attention output."""
    B, T, threeN = qkv.shape
    N = threeN // 3
    hd = N // n_heads
    tq = _pick_tile(T, tq, (128, 8))
    grid = (B, T // tq)
    kernel = functools.partial(_attn_kernel, n_heads=n_heads, scale=scale)
    return pl.pallas_call(
        kernel,
        out_shape=jax.ShapeDtypeStruct((n_heads, B, T, hd), jnp.bfloat16),
        grid_spec=pltpu.PrefetchScalarGridSpec(
            num_scalar_prefetch=0,
            grid=grid,
            in_specs=[
                # query rows for this step
                pl.BlockSpec((1, tq, threeN), lambda b, qi: (b, qi, 0)),
                # full-sequence kv slab (same array, constant block across qi -> no re-DMA)
                pl.BlockSpec((1, T, threeN), lambda b, qi: (b, 0, 0)),
            ],
            out_specs=pl.BlockSpec((n_heads, 1, tq, hd), lambda b, qi: (0, b, qi, 0)),
        ),
        compiler_params=pltpu.CompilerParams(
            dimension_semantics=("parallel", "parallel"),
            vmem_limit_bytes=VMEM_LIMIT,
        ),
    )(qkv, qkv)


# ---------------------------------------------------------------------------
# Kernel 3: c_proj with the head merge folded into its reduction axis
#           out = sum_h y_hm[h] @ W_proj[h*hd:(h+1)*hd, :] + b
# ---------------------------------------------------------------------------
def _proj_headmerge_kernel(y_ref, w_ref, b_ref, o_ref, acc_ref):
    h = pl.program_id(2)

    @pl.when(h == 0)
    def _():
        acc_ref[...] = jnp.zeros_like(acc_ref)

    acc_ref[...] += jnp.dot(y_ref[0].astype(jnp.bfloat16),
                            w_ref[0].astype(jnp.bfloat16),
                            preferred_element_type=jnp.float32)

    @pl.when(h == pl.num_programs(2) - 1)
    def _():
        o_ref[...] = (acc_ref[...] + b_ref[...]).astype(o_ref.dtype)


def pallas_proj_headmerge(y_hm, w_proj_hm, b, *, tm=512, tn=512):
    """y_hm: (NH, M, hd), w_proj_hm: (NH, hd, Nout), b: (Nout,) -> (M, Nout) f32.

    Equivalent to y.transpose(1,2).view(B,T,N) @ W_proj + b, without ever materializing
    the lane-merged (B, T, N) layout: NH is an extra "arbitrary" reduction grid axis.
    """
    NH, M, hd = y_hm.shape
    Nout = w_proj_hm.shape[2]
    tm = _pick_tile(M, tm)
    tn = _pick_tile(Nout, tn)
    b2d = b.reshape(1, Nout).astype(jnp.float32)
    grid = (M // tm, Nout // tn, NH)
    return pl.pallas_call(
        _proj_headmerge_kernel,
        out_shape=jax.ShapeDtypeStruct((M, Nout), jnp.float32),
        grid_spec=pltpu.PrefetchScalarGridSpec(
            num_scalar_prefetch=0,
            grid=grid,
            in_specs=[
                pl.BlockSpec((1, tm, hd), lambda i, j, h: (h, i, 0)),
                pl.BlockSpec((1, hd, tn), lambda i, j, h: (h, 0, j)),
                pl.BlockSpec((1, tn), lambda i, j, h: (0, j)),
            ],
            out_specs=pl.BlockSpec((tm, tn), lambda i, j, h: (i, j)),
            scratch_shapes=[pltpu.VMEM((tm, tn), jnp.float32)],
        ),
        compiler_params=pltpu.CompilerParams(
            dimension_semantics=("parallel", "parallel", "arbitrary"),
            vmem_limit_bytes=VMEM_LIMIT,
        ),
    )(y_hm, w_proj_hm, b2d)


# ---------------------------------------------------------------------------
# Full forward pass of CauseAttention
# ---------------------------------------------------------------------------
def cause_attention_forward(x, params, n_heads):
    """x: (B, T, N) float32 -> (B, T, N) float32."""
    B, T, N = x.shape
    hd = N // n_heads

    # Weights cast to bf16 once (halves weight HBM reads); biases stay f32 (f32 accumulate).
    w_attn = params["w_attn"].astype(jnp.bfloat16)
    w_proj_hm = params["w_proj"].astype(jnp.bfloat16).reshape(n_heads, hd, N)

    # c_attn: fused qkv projection, bf16 intermediate.
    # (reshape (B,T,N)<->(B*T,N) is a free row-major view)
    qkv = pallas_linear(x.reshape(B * T, N), w_attn, params["b_attn"],
                        out_dtype=jnp.bfloat16)
    qkv = qkv.reshape(B, T, 3 * N)

    # Attention: head-major (NH, B, T, hd) output, scale = 1/sqrt(T) as in the reference.
    y_hm = pallas_attention(qkv, n_heads, 1.0 / math.sqrt(T))
    y_hm = y_hm.reshape(n_heads, B * T, hd)          # free row-major view

    # c_proj with the head merge folded into its reduction over heads.
    out = pallas_proj_headmerge(y_hm, w_proj_hm, params["b_proj"])
    return out.reshape(B, T, N)


# ---------------------------------------------------------------------------
# Pure-JAX reference for verification
# ---------------------------------------------------------------------------
def reference_forward(x, params, n_heads):
    B, T, N = x.shape
    hd = N // n_heads
    qkv = x @ params["w_attn"] + params["b_attn"]
    q, k, v = jnp.split(qkv, 3, axis=-1)
    q = q.reshape(B, T, n_heads, hd).transpose(0, 2, 1, 3)
    k = k.reshape(B, T, n_heads, hd).transpose(0, 2, 1, 3)
    v = v.reshape(B, T, n_heads, hd).transpose(0, 2, 1, 3)
    att = (q @ jnp.swapaxes(k, -2, -1)) * (1.0 / math.sqrt(T))
    att = jax.nn.softmax(att, axis=-1)          # no causal mask (matches the reference bug)
    y = att @ v
    y = y.transpose(0, 2, 1, 3).reshape(B, T, N)
    return y @ params["w_proj"] + params["b_proj"]


if __name__ == "__main__":
    # Small shapes consistent with the module: batch=2, seq=16, n_embd=32, n_headers=4.
    B, T, N, NH = 2, 16, 32, 4

    key = jax.random.PRNGKey(0)
    kx, k1, k2, k3, k4 = jax.random.split(key, 5)

    x = jax.random.normal(kx, (B, T, N), dtype=jnp.float32)

    # Weights stored as (in, out) so kernels compute x @ W + b (== PyTorch nn.Linear).
    params = {
        "w_attn": 0.02 * jax.random.normal(k1, (N, 3 * N), dtype=jnp.float32),
        "b_attn": 0.01 * jax.random.normal(k2, (3 * N,), dtype=jnp.float32),
        "w_proj": 0.02 * jax.random.normal(k3, (N, N), dtype=jnp.float32),
        "b_proj": 0.01 * jax.random.normal(k4, (N,), dtype=jnp.float32),
    }

    out = jax.block_until_ready(cause_attention_forward(x, params, NH))
    ref = jax.block_until_ready(reference_forward(x, params, NH))
    # bf16 MXU operands + bf16 qkv/y intermediates + approx reciprocal -> loosened tolerance.
    np.testing.assert_allclose(np.asarray(out), np.asarray(ref), rtol=5e-2, atol=3e-3)

    print("KERNEL_OK")
</pallas_src>

<mosaic_0001>
module attributes {stable_mosaic.version = 11 : i64} {
  func.func @_linear_kernel(%arg0: i32, %arg1: i32, %arg2: i32, %arg3: memref<32x32xf32, #tpu.memory_space<vmem>>, %arg4: memref<32x96xbf16, #tpu.memory_space<vmem>>, %arg5: memref<1x96xf32, #tpu.memory_space<vmem>>, %arg6: memref<32x96xbf16, #tpu.memory_space<vmem>>, %arg7: memref<32x96xf32, #tpu.memory_space<vmem>>) attributes {dimension_semantics = [#tpu.dimension_semantics<parallel>, #tpu.dimension_semantics<parallel>, #tpu.dimension_semantics<arbitrary>], iteration_bounds = array<i64: 1, 1, 1>, scalar_prefetch = 0 : i64, scratch_operands = 1 : i64, tpu.core_type = #tpu.core_type<tc>, window_params = [{transform_indices = @transform_0, window_bounds = array<i64: 32, 32>}, {transform_indices = @transform_1, window_bounds = array<i64: 32, 96>}, {transform_indices = @transform_2, window_bounds = array<i64: 1, 96>}, {transform_indices = @transform_3, window_bounds = array<i64: 32, 96>}]} {
    %c0_i32 = arith.constant 0 : i32
    %0 = arith.cmpi eq, %arg2, %c0_i32 : i32
    %1 = arith.extui %0 : i1 to i32
    %c0_i32_0 = arith.constant 0 : i32
    %2 = arith.cmpi ne, %1, %c0_i32_0 : i32
    scf.if %2 {
      %cst_10 = arith.constant 0.000000e+00 : f32
      %13 = vector.broadcast %cst_10 : f32 to vector<32x96xf32>
      %c0_11 = arith.constant 0 : index
      %c0_12 = arith.constant 0 : index
      %14 = vector.load %arg7[%c0_11, %c0_12] : memref<32x96xf32, #tpu.memory_space<vmem>>, vector<32x96xf32>
      tpu.vector_store %arg7[%c0_11, %c0_12], %13 {strides = array<i32>} : memref<32x96xf32, #tpu.memory_space<vmem>>, vector<32x96xf32>,
    } else {
    }
    %c0 = arith.constant 0 : index
    %c0_1 = arith.constant 0 : index
    %3 = vector.load %arg7[%c0, %c0_1] : memref<32x96xf32, #tpu.memory_space<vmem>>, vector<32x96xf32>
    %c0_2 = arith.constant 0 : index
    %c0_3 = arith.constant 0 : index
    %4 = vector.load %arg3[%c0_2, %c0_3] : memref<32x32xf32, #tpu.memory_space<vmem>>, vector<32x32xf32>
    %5 = arith.truncf %4 : vector<32x32xf32> to vector<32x32xbf16>
    %c0_4 = arith.constant 0 : index
    %c0_5 = arith.constant 0 : index
    %6 = vector.load %arg4[%c0_4, %c0_5] : memref<32x96xbf16, #tpu.memory_space<vmem>>, vector<32x96xbf16>
    %cst = arith.constant dense<0.000000e+00> : vector<32x96xf32>
    %7 = tpu.matmul %5, %6, %cst {dimension_numbers = #tpu.dot_dimension_numbers<[1], [0], [0], [1], [0, 0, 1, 1], [], []>} : vector<32x32xbf16>, vector<32x96xbf16>, vector<32x96xf32> -> vector<32x96xf32>
    %8 = arith.addf %3, %7 : vector<32x96xf32>
    %c0_6 = arith.constant 0 : index
    %c0_7 = arith.constant 0 : index
    %9 = vector.load %arg7[%c0_6, %c0_7] : memref<32x96xf32, #tpu.memory_space<vmem>>, vector<32x96xf32>
    tpu.vector_store %arg7[%c0_6, %c0_7], %8 {strides = array<i32>} : memref<32x96xf32, #tpu.memory_space<vmem>>, vector<32x96xf32>,
    %c0_i32_8 = arith.constant 0 : i32
    %10 = arith.cmpi eq, %arg2, %c0_i32_8 : i32
    %11 = arith.extui %10 : i1 to i32
    %c0_i32_9 = arith.constant 0 : i32
    %12 = arith.cmpi ne, %11, %c0_i32_9 : i32
    scf.if %12 {
      %c0_10 = arith.constant 0 : index
      %c0_11 = arith.constant 0 : index
      %13 = vector.load %arg7[%c0_10, %c0_11] : memref<32x96xf32, #tpu.memory_space<vmem>>, vector<32x96xf32>
      %c0_12 = arith.constant 0 : index
      %c0_13 = arith.constant 0 : index
      %14 = vector.load %arg5[%c0_12, %c0_13] : memref<1x96xf32, #tpu.memory_space<vmem>>, vector<1x96xf32>
      %15 = vector.broadcast %14 : vector<1x96xf32> to vector<32x96xf32>
      %16 = arith.addf %13, %15 : vector<32x96xf32>
      %17 = arith.truncf %16 : vector<32x96xf32> to vector<32x96xbf16>
      %c0_14 = arith.constant 0 : index
      %c0_15 = arith.constant 0 : index
      %18 = vector.load %arg6[%c0_14, %c0_15] : memref<32x96xbf16, #tpu.memory_space<vmem>>, vector<32x96xbf16>
      tpu.vector_store %arg6[%c0_14, %c0_15], %17 {strides = array<i32>} : memref<32x96xbf16, #tpu.memory_space<vmem>>, vector<32x96xbf16>,
    } else {
    }
    return
  }
  func.func @transform_0(%arg0: i32, %arg1: i32, %arg2: i32) -> (i32, i32) {
    %c0_i32 = arith.constant 0 : i32
    return %arg0, %arg2 : i32, i32
  }
  func.func @transform_1(%arg0: i32, %arg1: i32, %arg2: i32) -> (i32, i32) {
    %c0_i32 = arith.constant 0 : i32
    return %arg2, %arg1 : i32, i32
  }
  func.func @transform_2(%arg0: i32, %arg1: i32, %arg2: i32) -> (i32, i32) {
    %c0_i32 = arith.constant 0 : i32
    %c0_i32_0 = arith.constant 0 : i32
    return %c0_i32, %arg1 : i32, i32
  }
  func.func @transform_3(%arg0: i32, %arg1: i32, %arg2: i32) -> (i32, i32) {
    %c0_i32 = arith.constant 0 : i32
    return %arg0, %arg1 : i32, i32
  }
}

</mosaic_0001>

<llo_original>
// kernel: tpu_custom_call.1
$region0: #{tpu_custom_call.1}
  #allocation0 [shape = 'u32[]', space=smem, size = 0x4, offset = 0x4, fixed_abs, tag = 'smem constant byte address 0x4 - core index']
  #allocation1 [shape = 'u32[144,128]{1,0:T(1,128)}', space=vmem, size = 0x12000, scoped, tag = 'internal scratch']
  #allocation2 [shape = 'f32[32,96]{1,0:T(8,128)}', space=vmem, size = 0x4000, scoped, tag = 'scratch operand']
  %s0 = inlined_call_operand.hbm [shape: f32[32,32], index: 0, kind: input, shape index: {}]
  %s1 = inlined_call_operand.hbm [shape: bf16[32,96], index: 1, kind: input, shape index: {}]
  %s2 = inlined_call_operand.vmem [shape: f32[1,96], index: 2, kind: input, shape index: {}]
  %s3 = inlined_call_operand.hbm [shape: bf16[32,96], index: 3, kind: output, shape index: {}]
  %s4 = sld [smem:[#allocation0]]
  $region38: #{tpu_custom_call.1} parent=0
    _
  %s6 = ssub.s32 1, %s4
  %s7 = scalar_select 0, %s6, %s4
  $region1: #{tpu_custom_call.1} parent=0
    #allocation3 [shape = 'u8[16384]{0}', space=vmem, size = 0x4000, scoped, tag = 'input window, operand 0, single buffered']
    #allocation4 [shape = 's32[1]{0}', space=sflag, size = 0x4, scoped, tag = 'scoped memory for tpu_custom_call.1']
    #allocation5 [shape = 's32[1]{0}', space=sflag, size = 0x4, scoped, tag = 'scoped memory for tpu_custom_call.1']
    #allocation6 [shape = 'u8[8192]{0}', space=vmem, size = 0x2000, scoped, tag = 'input window, operand 1, single buffered']
    #allocation7 [shape = 's32[1]{0}', space=sflag, size = 0x4, scoped, tag = 'scoped memory for tpu_custom_call.1']
    #allocation8 [shape = 'u8[8192]{0}', space=vmem, size = 0x2000, scoped, tag = 'output window, operand 0, single buffered']
    %8 = vsyncpa [#allocation4], 0
    %9 = vsyncpa [#allocation7], 0
    %10 = vsyncpa [#allocation5], 0
    // Predicated region
    $region2: #{tpu_custom_call.1} parent=1 // pred_check
      _
    $region3: #{tpu_custom_call.1} parent=1 // pred_check_branch
      %12 = sbr.rel (0) target = $region5
    $region4: #{tpu_custom_call.1} parent=1 // pred_region
      %s14 = ssub.s32 512, 512
      %15 = vsyncadd [#allocation4], %s14
      %s16 = sshll.u32 [#allocation3], 4
      %s17 = int_to_ptr.vmem [resolvable:$true] %s16
      %22 = dma.hbm_to_vmem [thread:$0]  %s0, 512, %s17, [#allocation4], 128, 128, 8
    $region5: #{tpu_custom_call.1} parent=1 // pred_fallthru
      _
    // Predicated region
    $region6: #{tpu_custom_call.1} parent=1 // pred_check
      _
    $region7: #{tpu_custom_call.1} parent=1 // pred_check_branch
      %24 = sbr.rel (0) target = $region9
    $region8: #{tpu_custom_call.1} parent=1 // pred_region
      %s26 = ssub.s32 256, 256
      %27 = vsyncadd [#allocation7], %s26
      %s28 = sshll.u32 [#allocation6], 4
      %s29 = int_to_ptr.vmem [resolvable:$true] %s28
      %34 = dma.hbm_to_vmem [thread:$0]  %s1, 256, %s29, [#allocation7], 64, 64, 4
    $region9: #{tpu_custom_call.1} parent=1 // pred_fallthru
      _
    // Predicated region
    $region10: #{tpu_custom_call.1} parent=1 // pred_check
      _
    $region11: #{tpu_custom_call.1} parent=1 // pred_check_branch
      %36 = sbr.rel (0) target = $region13
    $region12: #{tpu_custom_call.1} parent=1 // pred_region
      _
    $region13: #{tpu_custom_call.1} parent=1 // pred_fallthru
      _
    // Predicated region
    $region14: #{tpu_custom_call.1} parent=1 // pred_check
      _
    $region15: #{tpu_custom_call.1} parent=1 // pred_check_branch
      %38 = sbr.rel (0) target = $region17
    $region16: #{tpu_custom_call.1} parent=1 // pred_region
      %39 = dma.done [#allocation4], 512
    $region17: #{tpu_custom_call.1} parent=1 // pred_fallthru
      _
    // Predicated region
    $region18: #{tpu_custom_call.1} parent=1 // pred_check
      _
    $region19: #{tpu_custom_call.1} parent=1 // pred_check_branch
      %41 = sbr.rel (0) target = $region21
    $region20: #{tpu_custom_call.1} parent=1 // pred_region
      %42 = dma.done [#allocation7], 256
    $region21: #{tpu_custom_call.1} parent=1 // pred_fallthru
      _
    %p44 = scmp.eq.s32.totalorder 0, 0
    // Predicated region
    $region22: #{tpu_custom_call.1} parent=1 // pred_check
      %p45 = pneg %p44
    $region23: #{tpu_custom_call.1} parent=1 // pred_check_branch
      %47 = sbr.rel (%p45) target = $region25
    $region24: #{tpu_custom_call.1} parent=1 // pred_region
      %vm48 = vcmask 785408
      %49 = vst.msk [vmem:[#allocation2] sm:$0xff] %vm48, 0.0
      %50 = vst.msk [vmem:[#allocation2 + $0x8] sm:$0xff] %vm48, 0.0
      %51 = vst.msk [vmem:[#allocation2 + $0x10] sm:$0xff] %vm48, 0.0
      %52 = vst.msk [vmem:[#allocation2 + $0x18] sm:$0xff] %vm48, 0.0
    $region25: #{tpu_custom_call.1} parent=1 // pred_fallthru
      _
    %v53 = vld [vmem:[#allocation2] sm:$0xff]
    %v54 = vld [vmem:[#allocation2 + $0x8] sm:$0xff]
    %v55 = vld [vmem:[#allocation2 + $0x10] sm:$0xff]
    %v56 = vld [vmem:[#allocation2 + $0x18] sm:$0xff]
    %v57 = vld [vmem:[#allocation3] sm:$0xff]
    %v58 = vld [vmem:[#allocation3 + $0x8] sm:$0xff]
    %v59 = vld [vmem:[#allocation3 + $0x10] sm:$0xff]
    %v60 = vld [vmem:[#allocation3 + $0x18] sm:$0xff]
    %v61 = vpack.c.bf16 %v58, %v57
    %v62 = vpack.c.bf16 %v60, %v59
    %v63 = vld [vmem:[#allocation6] sm:$0xf]
    %v64 = vld [vmem:[#allocation6 + $0x4] sm:$0xf]
    %v65 = vld [vmem:[#allocation6 + $0x8] sm:$0xf]
    %v66 = vld [vmem:[#allocation6 + $0xc] sm:$0xf]
    %v71 = vunpack.c.l.b16 %v63
    %v72 = vunpack.c.l.b16 %v64
    %v73 = vunpack.c.l.b16 %v65
    %v74 = vunpack.c.l.b16 %v66
    %v75 = vpack.c.b16 %v72, %v71
    %v76 = vpack.c.b16 %v74, %v73
    %vm79 = vcmask 261120
    %v81 = vsel %vm79, %v61, 0
    %v84 = vsel %vm79, %v62, 0
    %86 = vmatprep.subr.bf16.mxu0 0
    %87 = vmatpush1.bf16.msra.mxu0 %v75
    %88 = vmatprep.subr.bf16.mxu0 0
    %89 = vmatpush1.bf16.msra.mxu0 %v76
    %90 = vmatprep.subr.bf16.mxu0 0
    %91 = vmatpush1.bf16.msra.mxu0 0
    %92 = vmatprep.subr.bf16.mxu0 0
    %93 = vmatpush1.bf16.msra.mxu0 0
    %94 = vmatprep.subr.bf16.mxu0 0
    %95 = vmatpush1.bf16.msra.mxu0 0
    %96 = vmatprep.subr.bf16.mxu0 0
    %97 = vmatpush1.bf16.msra.mxu0 0
    %98 = vmatprep.subr.bf16.mxu0 0
    %99 = vmatpush1.bf16.msra.mxu0 0
    %100 = vmatprep.subr.bf16.mxu0 0
    %101 = vmatpush1.bf16.msra.mxu0 0
    %102 = vmatprep.subr.bf16.mxu0 0
    %103 = vmatpush1.bf16.msra.mxu0 0
    %104 = vmatprep.subr.bf16.mxu0 0
    %105 = vmatpush1.bf16.msra.mxu0 0
    %106 = vmatprep.subr.bf16.mxu0 0
    %107 = vmatpush1.bf16.msra.mxu0 0
    %108 = vmatprep.subr.bf16.mxu0 0
    %109 = vmatpush1.bf16.msra.mxu0 0
    %110 = vmatprep.subr.bf16.mxu0 0
    %111 = vmatpush1.bf16.msra.mxu0 0
    %112 = vmatprep.subr.bf16.mxu0 0
    %113 = vmatpush1.bf16.msra.mxu0 0
    %114 = vmatprep.subr.bf16.mxu0 0
    %115 = vmatpush1.bf16.msra.mxu0 0
    %116 = vmatprep.subr.bf16.mxu0 0
    %117 = vmatpush1.bf16.msra.mxu0 0
    %118 = vmatprep.mubr.bf16.mxu0 0
    %119 = vmatmul.mubr.bf16.gmra.mrb[0].mxu0 %v81
    %v120 = vpop.f32.mrb[0].mxu0
    %v121 = vadd.f32 0.0, %v120
    %v122 = vpop.f32.mrb[0].mxu0
    %v123 = vpop.f32.mrb[0].mxu0
    %v124 = vadd.f32 0.0, %v123
    %v125 = vpop.f32.mrb[0].mxu0
    %126 = vmatprep.mubr.bf16.mxu0 0
    %127 = vmatmul.mubr.bf16.gmra.mrb[0].mxu0 %v84
    %v128 = vpop.f32.mrb[0].mxu0
    %v129 = vadd.f32 0.0, %v128
    %v130 = vpop.f32.mrb[0].mxu0
    %v131 = vpop.f32.mrb[0].mxu0
    %v132 = vadd.f32 0.0, %v131
    %v133 = vpop.f32.mrb[0].mxu0
    %134 = vdwg.mxu0
    %v135 = vadd.f32 %v53, %v121
    %v136 = vadd.f32 %v54, %v124
    %v137 = vadd.f32 %v55, %v129
    %v138 = vadd.f32 %v56, %v132
    %vm139 = vcmask 785408
    %140 = vst.msk [vmem:[#allocation2] sm:$0xff] %vm139, %v135
    %141 = vst.msk [vmem:[#allocation2 + $0x8] sm:$0xff] %vm139, %v136
    %142 = vst.msk [vmem:[#allocation2 + $0x10] sm:$0xff] %vm139, %v137
    %143 = vst.msk [vmem:[#allocation2 + $0x18] sm:$0xff] %vm139, %v138
    // Predicated region
    $region26: #{tpu_custom_call.1} parent=1 // pred_check
      %p144 = pneg %p44
    $region27: #{tpu_custom_call.1} parent=1 // pred_check_branch
      %146 = sbr.rel (%p144) target = $region29
    $region28: #{tpu_custom_call.1} parent=1 // pred_region
      %v147 = vld [vmem:[#allocation2] sm:$0xff]
      %v148 = vld [vmem:[#allocation2 + $0x8] sm:$0xff]
      %v149 = vld [vmem:[#allocation2 + $0x10] sm:$0xff]
      %v150 = vld [vmem:[#allocation2 + $0x18] sm:$0xff]
      %v151 = vld [vmem:[%s2] sm:$0x1]
      %v153 = vlaneseq
      %v154 = vshrl.u32 %v153, 7
      %v155 = vsub.s32 0, %v154
      %v156 = vrot.slane %v151, %v155
      %v158 = vadd.f32 %v147, %v156
      %v159 = vadd.f32 %v148, %v156
      %v160 = vadd.f32 %v149, %v156
      %v161 = vadd.f32 %v150, %v156
      %v162 = vpack.c.bf16 %v159, %v158
      %v163 = vpack.c.bf16 %v161, %v160
      %v166 = vunpack.c.l.b16 %v162
      %v167 = vunpack.c.h.b16 %v162
      %v168 = vunpack.c.l.b16 %v163
      %v169 = vunpack.c.h.b16 %v163
      %v170 = vpack.c.b16 %v166, %v166
      %v171 = vpack.c.b16 %v167, %v167
      %v172 = vpack.c.b16 %v168, %v168
      %v173 = vpack.c.b16 %v169, %v169
      %vm178 = vcmask 781312
      %179 = vst.msk [vmem:[#allocation8] sm:$0xf] %vm178, %v170
      %180 = vst.msk [vmem:[#allocation8 + $0x4] sm:$0xf] %vm178, %v171
      %181 = vst.msk [vmem:[#allocation8 + $0x8] sm:$0xf] %vm178, %v172
      %182 = vst.msk [vmem:[#allocation8 + $0xc] sm:$0xf] %vm178, %v173
    $region29: #{tpu_custom_call.1} parent=1 // pred_fallthru
      _
    // Predicated region
    $region30: #{tpu_custom_call.1} parent=1 // pred_check
      _
    $region31: #{tpu_custom_call.1} parent=1 // pred_check_branch
      %184 = sbr.rel (0) target = $region33
    $region32: #{tpu_custom_call.1} parent=1 // pred_region
      %s186 = ssub.s32 256, 256
      %187 = vsyncadd [#allocation5], %s186
      %s188 = sshll.u32 [#allocation8], 4
      %s189 = int_to_ptr.vmem [resolvable:$true] %s188
      %194 = dma.vmem_to_hbm [thread:$0]  %s189, 256, %s3, [#allocation5], 64, 64, 4
    $region33: #{tpu_custom_call.1} parent=1 // pred_fallthru
      _
    // Predicated region
    $region34: #{tpu_custom_call.1} parent=1 // pred_check
      _
    $region35: #{tpu_custom_call.1} parent=1 // pred_check_branch
      %196 = sbr.rel (0) target = $region37
    $region36: #{tpu_custom_call.1} parent=1 // pred_region
      %197 = dma.done [#allocation5], 256
    $region37: #{tpu_custom_call.1} parent=1 // pred_fallthru
      _
    %198 = vsyncpa [#allocation4], 1
    %199 = vsyncpa [#allocation7], 1
    %200 = vsyncpa [#allocation5], 1

</llo_original>
